<compile_context>
chip_gen: v7x
topology: tpu7x:2x2x1
jax: 0.10.0
libtpu: 0.0.40
codegen_flags: <defaults>
</compile_context>

<pallas_src>
import math

import jax
import jax.numpy as jnp
from jax.experimental import pallas as pl
from jax.experimental.pallas import tpu as pltpu


def _conv1x1_pad1_hardswish_kernel(w_ref, b_ref, x_ref, o_ref, xpad_ref):
    """One grid step = one image; all output channels computed in-body.

    w_ref    : SMEM (Cout, Cin) f32   -- 1x1 conv weight matrix
    b_ref    : SMEM (Cout,)     f32   -- bias
    x_ref    : VMEM (1, Cin, H, W)    -- unpadded input planes of image n
    o_ref    : VMEM (1, Cout, Hp, Wp) -- all output planes of image n
    xpad_ref : VMEM (Cin, Hp, Wp)     -- scratch: zero-padded input planes
    """
    cin = x_ref.shape[1]
    cout = o_ref.shape[1]
    h, w = x_ref.shape[2], x_ref.shape[3]

    # Fused padding=1: zero the scratch frame, then place the unpadded planes
    # at offset (1, 1).  Zeroing every step is required for correctness under
    # megacore sharding (each core has its own scratch) and is negligible
    # VMEM-only traffic (~52 KB).
    xpad_ref[...] = jnp.zeros_like(xpad_ref)
    xpad_ref[:, 1:h + 1, 1:w + 1] = x_ref[0]

    # 1x1 conv == per-pixel linear combination of input channels:
    # scalar (SMEM) * plane FMAs on the VPU, statically unrolled (Cin=Cout=3).
    for c in range(cout):
        v = w_ref[c, 0] * xpad_ref[0]
        for k in range(1, cin):
            v = v + w_ref[c, k] * xpad_ref[k]
        v = v + b_ref[c]
        # module tail: v1 * clamp(v1 + 3, 0, 6) / 6   (hardswish)
        o_ref[0, c] = v * jnp.clip(v + 3.0, 0.0, 6.0) * (1.0 / 6.0)


def conv1x1_pad1_hardswish(x_nchw, weight, bias):
    """x_nchw: (N, Cin, H, W) f32; weight: (Cout, Cin, 1, 1); bias: (Cout,).

    Reproduces Conv2d(Cin, Cout, 1, stride=1, padding=1) followed by
    v1 * clamp(v1 + 3, 0, 6) / 6.  Output: (N, Cout, H + 2, W + 2).
    """
    n, cin, h, w = x_nchw.shape
    cout = weight.shape[0]
    hp, wp = h + 2, w + 2

    w_mat = weight.reshape(cout, cin).astype(jnp.float32)   # (Cout, Cin) -> SMEM
    b_vec = bias.reshape(cout).astype(jnp.float32)          # (Cout,)     -> SMEM

    # Per-step VMEM: 48 KB input + 51 KB output (x2 double-buffer) + 51 KB
    # scratch  << VMEM on every generation (incl. v7x 64 MiB) -- no need to
    # shrink blocks or deepen pipelining.
    return pl.pallas_call(
        _conv1x1_pad1_hardswish_kernel,
        out_shape=jax.ShapeDtypeStruct((n, cout, hp, wp), x_nchw.dtype),
        grid=(n,),
        in_specs=[
            pl.BlockSpec(memory_space=pltpu.MemorySpace.SMEM),     # weights
            pl.BlockSpec(memory_space=pltpu.MemorySpace.SMEM),     # bias
            pl.BlockSpec((1, cin, h, w), lambda i: (i, 0, 0, 0)),  # image n
        ],
        out_specs=pl.BlockSpec((1, cout, hp, wp), lambda i: (i, 0, 0, 0)),
        scratch_shapes=[pltpu.VMEM((cin, hp, wp), jnp.float32)],
        compiler_params=pltpu.CompilerParams(
            dimension_semantics=("parallel",)),
    )(w_mat, b_vec, x_nchw)


def _reference(x_nchw, weight, bias):
    # Pure-JAX reference (explicit f32 broadcast-sum; avoids matmul-precision
    # ambiguity of einsum on TPU).
    xpad = jnp.pad(x_nchw, ((0, 0), (0, 0), (1, 1), (1, 1)))
    w = weight.reshape(weight.shape[0], weight.shape[1])        # (Cout, Cin)
    v1 = jnp.sum(xpad[:, None] * w[None, :, :, None, None], axis=2) \
         + bias[None, :, None, None]
    v3 = jnp.clip(v1 + 3.0, 0.0, 6.0)
    return v1 * v3 / 6.0


if __name__ == "__main__":
    key = jax.random.PRNGKey(0)
    kx, kw, kb = jax.random.split(key, 3)

    # Shapes from the module: x1 = torch.randn(2, 3, 64, 64), Conv2d(3, 3, 1, padding=1).
    N, C, H, W = 2, 3, 64, 64
    x = jax.random.normal(kx, (N, C, H, W), dtype=jnp.float32)

    # Deterministic parameter init (uniform, PyTorch-Conv2d-like bound).
    fan_in = C * 1 * 1
    bound = 1.0 / math.sqrt(fan_in)
    weight = jax.random.uniform(kw, (3, 3, 1, 1), jnp.float32, -bound, bound)
    bias = jax.random.uniform(kb, (3,), jnp.float32, -bound, bound)

    out = jax.jit(conv1x1_pad1_hardswish)(x, weight, bias)
    out = jax.block_until_ready(out)

    ref = _reference(x, weight, bias)
    assert out.shape == (N, 3, H + 2, W + 2), out.shape
    assert jnp.allclose(out, ref, atol=1e-5, rtol=1e-5)

    print("KERNEL_OK")
</pallas_src>

<mosaic_0001>
module attributes {stable_mosaic.version = 11 : i64} {
  func.func @_conv1x1_pad1_hardswish_kernel(%arg0: i32, %arg1: memref<3x3xf32, #tpu.memory_space<smem>>, %arg2: memref<3xf32, #tpu.memory_space<smem>>, %arg3: memref<1x3x64x64xf32, #tpu.memory_space<vmem>>, %arg4: memref<1x3x66x66xf32, #tpu.memory_space<vmem>>, %arg5: memref<3x66x66xf32, #tpu.memory_space<vmem>>) attributes {dimension_semantics = [#tpu.dimension_semantics<parallel>], iteration_bounds = array<i64: 2>, scalar_prefetch = 0 : i64, scratch_operands = 1 : i64, tpu.core_type = #tpu.core_type<tc>, window_params = [{transform_indices = @transform_0, window_bounds = array<i64: 3, 3>}, {transform_indices = @transform_1, window_bounds = array<i64: 3>}, {transform_indices = @transform_2, window_bounds = array<i64: 1, 3, 64, 64>}, {transform_indices = @transform_3, window_bounds = array<i64: 1, 3, 66, 66>}]} {
    %cst = arith.constant 0.000000e+00 : f32
    %0 = vector.broadcast %cst : f32 to vector<3x66x66xf32>
    %c0 = arith.constant 0 : index
    %c0_0 = arith.constant 0 : index
    %c0_1 = arith.constant 0 : index
    %1 = vector.load %arg5[%c0, %c0_0, %c0_1] : memref<3x66x66xf32, #tpu.memory_space<vmem>>, vector<3x66x66xf32>
    tpu.vector_store %arg5[%c0, %c0_0, %c0_1], %0 {strides = array<i32>} : memref<3x66x66xf32, #tpu.memory_space<vmem>>, vector<3x66x66xf32>,
    %c0_2 = arith.constant 0 : index
    %c0_3 = arith.constant 0 : index
    %c0_4 = arith.constant 0 : index
    %c0_5 = arith.constant 0 : index
    %2 = vector.load %arg3[%c0_2, %c0_3, %c0_4, %c0_5] : memref<1x3x64x64xf32, #tpu.memory_space<vmem>>, vector<1x3x64x64xf32>
    %3 = vector.shape_cast %2 : vector<1x3x64x64xf32> to vector<3x64x64xf32>
    %c0_6 = arith.constant 0 : index
    %c1 = arith.constant 1 : index
    %c1_7 = arith.constant 1 : index
    %4 = vector.load %arg5[%c0_6, %c1, %c1_7] : memref<3x66x66xf32, #tpu.memory_space<vmem>>, vector<3x64x64xf32>
    tpu.vector_store %arg5[%c0_6, %c1, %c1_7], %3 {strides = array<i32>} : memref<3x66x66xf32, #tpu.memory_space<vmem>>, vector<3x64x64xf32>,
    %c0_8 = arith.constant 0 : index
    %c0_9 = arith.constant 0 : index
    %5 = memref.load %arg1[%c0_8, %c0_9] : memref<3x3xf32, #tpu.memory_space<smem>>
    %c0_10 = arith.constant 0 : index
    %c0_11 = arith.constant 0 : index
    %c0_12 = arith.constant 0 : index
    %6 = vector.load %arg5[%c0_10, %c0_11, %c0_12] : memref<3x66x66xf32, #tpu.memory_space<vmem>>, vector<1x66x66xf32>
    %7 = vector.shape_cast %6 : vector<1x66x66xf32> to vector<66x66xf32>
    %8 = vector.broadcast %5 : f32 to vector<66x66xf32>
    %9 = arith.mulf %8, %7 : vector<66x66xf32>
    %c0_13 = arith.constant 0 : index
    %c1_14 = arith.constant 1 : index
    %10 = memref.load %arg1[%c0_13, %c1_14] : memref<3x3xf32, #tpu.memory_space<smem>>
    %c1_15 = arith.constant 1 : index
    %c0_16 = arith.constant 0 : index
    %c0_17 = arith.constant 0 : index
    %11 = vector.load %arg5[%c1_15, %c0_16, %c0_17] : memref<3x66x66xf32, #tpu.memory_space<vmem>>, vector<1x66x66xf32>
    %12 = vector.shape_cast %11 : vector<1x66x66xf32> to vector<66x66xf32>
    %13 = vector.broadcast %10 : f32 to vector<66x66xf32>
    %14 = arith.mulf %13, %12 : vector<66x66xf32>
    %15 = arith.addf %9, %14 : vector<66x66xf32>
    %c0_18 = arith.constant 0 : index
    %c2 = arith.constant 2 : index
    %16 = memref.load %arg1[%c0_18, %c2] : memref<3x3xf32, #tpu.memory_space<smem>>
    %c2_19 = arith.constant 2 : index
    %c0_20 = arith.constant 0 : index
    %c0_21 = arith.constant 0 : index
    %17 = vector.load %arg5[%c2_19, %c0_20, %c0_21] : memref<3x66x66xf32, #tpu.memory_space<vmem>>, vector<1x66x66xf32>
    %18 = vector.shape_cast %17 : vector<1x66x66xf32> to vector<66x66xf32>
    %19 = vector.broadcast %16 : f32 to vector<66x66xf32>
    %20 = arith.mulf %19, %18 : vector<66x66xf32>
    %21 = arith.addf %15, %20 : vector<66x66xf32>
    %c0_22 = arith.constant 0 : index
    %22 = memref.load %arg2[%c0_22] : memref<3xf32, #tpu.memory_space<smem>>
    %23 = vector.broadcast %22 : f32 to vector<66x66xf32>
    %24 = arith.addf %21, %23 : vector<66x66xf32>
    %cst_23 = arith.constant 3.000000e+00 : f32
    %25 = vector.broadcast %cst_23 : f32 to vector<66x66xf32>
    %26 = arith.addf %24, %25 : vector<66x66xf32>
    %cst_24 = arith.constant 0.000000e+00 : f32
    %cst_25 = arith.constant 6.000000e+00 : f32
    %27 = vector.broadcast %cst_24 : f32 to vector<66x66xf32>
    %28 = arith.maximumf %27, %26 : vector<66x66xf32>
    %29 = vector.broadcast %cst_25 : f32 to vector<66x66xf32>
    %30 = arith.minimumf %29, %28 : vector<66x66xf32>
    %31 = arith.mulf %24, %30 : vector<66x66xf32>
    %cst_26 = arith.constant 0.166666672 : f32
    %32 = vector.broadcast %cst_26 : f32 to vector<66x66xf32>
    %33 = arith.mulf %31, %32 : vector<66x66xf32>
    %c0_27 = arith.constant 0 : index
    %c0_28 = arith.constant 0 : index
    %c0_29 = arith.constant 0 : index
    %c0_30 = arith.constant 0 : index
    %34 = vector.load %arg4[%c0_27, %c0_28, %c0_29, %c0_30] : memref<1x3x66x66xf32, #tpu.memory_space<vmem>>, vector<1x1x66x66xf32>
    %35 = vector.shape_cast %34 : vector<1x1x66x66xf32> to vector<66x66xf32>
    %36 = vector.shape_cast %33 : vector<66x66xf32> to vector<1x1x66x66xf32>
    tpu.vector_store %arg4[%c0_27, %c0_28, %c0_29, %c0_30], %36 {strides = array<i32>} : memref<1x3x66x66xf32, #tpu.memory_space<vmem>>, vector<1x1x66x66xf32>,
    %c1_31 = arith.constant 1 : index
    %c0_32 = arith.constant 0 : index
    %37 = memref.load %arg1[%c1_31, %c0_32] : memref<3x3xf32, #tpu.memory_space<smem>>
    %c0_33 = arith.constant 0 : index
    %c0_34 = arith.constant 0 : index
    %c0_35 = arith.constant 0 : index
    %38 = vector.load %arg5[%c0_33, %c0_34, %c0_35] : memref<3x66x66xf32, #tpu.memory_space<vmem>>, vector<1x66x66xf32>
    %39 = vector.shape_cast %38 : vector<1x66x66xf32> to vector<66x66xf32>
    %40 = vector.broadcast %37 : f32 to vector<66x66xf32>
    %41 = arith.mulf %40, %39 : vector<66x66xf32>
    %c1_36 = arith.constant 1 : index
    %c1_37 = arith.constant 1 : index
    %42 = memref.load %arg1[%c1_36, %c1_37] : memref<3x3xf32, #tpu.memory_space<smem>>
    %c1_38 = arith.constant 1 : index
    %c0_39 = arith.constant 0 : index
    %c0_40 = arith.constant 0 : index
    %43 = vector.load %arg5[%c1_38, %c0_39, %c0_40] : memref<3x66x66xf32, #tpu.memory_space<vmem>>, vector<1x66x66xf32>
    %44 = vector.shape_cast %43 : vector<1x66x66xf32> to vector<66x66xf32>
    %45 = vector.broadcast %42 : f32 to vector<66x66xf32>
    %46 = arith.mulf %45, %44 : vector<66x66xf32>
    %47 = arith.addf %41, %46 : vector<66x66xf32>
    %c1_41 = arith.constant 1 : index
    %c2_42 = arith.constant 2 : index
    %48 = memref.load %arg1[%c1_41, %c2_42] : memref<3x3xf32, #tpu.memory_space<smem>>
    %c2_43 = arith.constant 2 : index
    %c0_44 = arith.constant 0 : index
    %c0_45 = arith.constant 0 : index
    %49 = vector.load %arg5[%c2_43, %c0_44, %c0_45] : memref<3x66x66xf32, #tpu.memory_space<vmem>>, vector<1x66x66xf32>
    %50 = vector.shape_cast %49 : vector<1x66x66xf32> to vector<66x66xf32>
    %51 = vector.broadcast %48 : f32 to vector<66x66xf32>
    %52 = arith.mulf %51, %50 : vector<66x66xf32>
    %53 = arith.addf %47, %52 : vector<66x66xf32>
    %c1_46 = arith.constant 1 : index
    %54 = memref.load %arg2[%c1_46] : memref<3xf32, #tpu.memory_space<smem>>
    %55 = vector.broadcast %54 : f32 to vector<66x66xf32>
    %56 = arith.addf %53, %55 : vector<66x66xf32>
    %cst_47 = arith.constant 3.000000e+00 : f32
    %57 = vector.broadcast %cst_47 : f32 to vector<66x66xf32>
    %58 = arith.addf %56, %57 : vector<66x66xf32>
    %cst_48 = arith.constant 0.000000e+00 : f32
    %cst_49 = arith.constant 6.000000e+00 : f32
    %59 = vector.broadcast %cst_48 : f32 to vector<66x66xf32>
    %60 = arith.maximumf %59, %58 : vector<66x66xf32>
    %61 = vector.broadcast %cst_49 : f32 to vector<66x66xf32>
    %62 = arith.minimumf %61, %60 : vector<66x66xf32>
    %63 = arith.mulf %56, %62 : vector<66x66xf32>
    %cst_50 = arith.constant 0.166666672 : f32
    %64 = vector.broadcast %cst_50 : f32 to vector<66x66xf32>
    %65 = arith.mulf %63, %64 : vector<66x66xf32>
    %c0_51 = arith.constant 0 : index
    %c1_52 = arith.constant 1 : index
    %c0_53 = arith.constant 0 : index
    %c0_54 = arith.constant 0 : index
    %66 = vector.load %arg4[%c0_51, %c1_52, %c0_53, %c0_54] : memref<1x3x66x66xf32, #tpu.memory_space<vmem>>, vector<1x1x66x66xf32>
    %67 = vector.shape_cast %66 : vector<1x1x66x66xf32> to vector<66x66xf32>
    %68 = vector.shape_cast %65 : vector<66x66xf32> to vector<1x1x66x66xf32>
    tpu.vector_store %arg4[%c0_51, %c1_52, %c0_53, %c0_54], %68 {strides = array<i32>} : memref<1x3x66x66xf32, #tpu.memory_space<vmem>>, vector<1x1x66x66xf32>,
    %c2_55 = arith.constant 2 : index
    %c0_56 = arith.constant 0 : index
    %69 = memref.load %arg1[%c2_55, %c0_56] : memref<3x3xf32, #tpu.memory_space<smem>>
    %c0_57 = arith.constant 0 : index
    %c0_58 = arith.constant 0 : index
    %c0_59 = arith.constant 0 : index
    %70 = vector.load %arg5[%c0_57, %c0_58, %c0_59] : memref<3x66x66xf32, #tpu.memory_space<vmem>>, vector<1x66x66xf32>
    %71 = vector.shape_cast %70 : vector<1x66x66xf32> to vector<66x66xf32>
    %72 = vector.broadcast %69 : f32 to vector<66x66xf32>
    %73 = arith.mulf %72, %71 : vector<66x66xf32>
    %c2_60 = arith.constant 2 : index
    %c1_61 = arith.constant 1 : index
    %74 = memref.load %arg1[%c2_60, %c1_61] : memref<3x3xf32, #tpu.memory_space<smem>>
    %c1_62 = arith.constant 1 : index
    %c0_63 = arith.constant 0 : index
    %c0_64 = arith.constant 0 : index
    %75 = vector.load %arg5[%c1_62, %c0_63, %c0_64] : memref<3x66x66xf32, #tpu.memory_space<vmem>>, vector<1x66x66xf32>
    %76 = vector.shape_cast %75 : vector<1x66x66xf32> to vector<66x66xf32>
    %77 = vector.broadcast %74 : f32 to vector<66x66xf32>
    %78 = arith.mulf %77, %76 : vector<66x66xf32>
    %79 = arith.addf %73, %78 : vector<66x66xf32>
    %c2_65 = arith.constant 2 : index
    %c2_66 = arith.constant 2 : index
    %80 = memref.load %arg1[%c2_65, %c2_66] : memref<3x3xf32, #tpu.memory_space<smem>>
    %c2_67 = arith.constant 2 : index
    %c0_68 = arith.constant 0 : index
    %c0_69 = arith.constant 0 : index
    %81 = vector.load %arg5[%c2_67, %c0_68, %c0_69] : memref<3x66x66xf32, #tpu.memory_space<vmem>>, vector<1x66x66xf32>
    %82 = vector.shape_cast %81 : vector<1x66x66xf32> to vector<66x66xf32>
    %83 = vector.broadcast %80 : f32 to vector<66x66xf32>
    %84 = arith.mulf %83, %82 : vector<66x66xf32>
    %85 = arith.addf %79, %84 : vector<66x66xf32>
    %c2_70 = arith.constant 2 : index
    %86 = memref.load %arg2[%c2_70] : memref<3xf32, #tpu.memory_space<smem>>
    %87 = vector.broadcast %86 : f32 to vector<66x66xf32>
    %88 = arith.addf %85, %87 : vector<66x66xf32>
    %cst_71 = arith.constant 3.000000e+00 : f32
    %89 = vector.broadcast %cst_71 : f32 to vector<66x66xf32>
    %90 = arith.addf %88, %89 : vector<66x66xf32>
    %cst_72 = arith.constant 0.000000e+00 : f32
    %cst_73 = arith.constant 6.000000e+00 : f32
    %91 = vector.broadcast %cst_72 : f32 to vector<66x66xf32>
    %92 = arith.maximumf %91, %90 : vector<66x66xf32>
    %93 = vector.broadcast %cst_73 : f32 to vector<66x66xf32>
    %94 = arith.minimumf %93, %92 : vector<66x66xf32>
    %95 = arith.mulf %88, %94 : vector<66x66xf32>
    %cst_74 = arith.constant 0.166666672 : f32
    %96 = vector.broadcast %cst_74 : f32 to vector<66x66xf32>
    %97 = arith.mulf %95, %96 : vector<66x66xf32>
    %c0_75 = arith.constant 0 : index
    %c2_76 = arith.constant 2 : index
    %c0_77 = arith.constant 0 : index
    %c0_78 = arith.constant 0 : index
    %98 = vector.load %arg4[%c0_75, %c2_76, %c0_77, %c0_78] : memref<1x3x66x66xf32, #tpu.memory_space<vmem>>, vector<1x1x66x66xf32>
    %99 = vector.shape_cast %98 : vector<1x1x66x66xf32> to vector<66x66xf32>
    %100 = vector.shape_cast %97 : vector<66x66xf32> to vector<1x1x66x66xf32>
    tpu.vector_store %arg4[%c0_75, %c2_76, %c0_77, %c0_78], %100 {strides = array<i32>} : memref<1x3x66x66xf32, #tpu.memory_space<vmem>>, vector<1x1x66x66xf32>,
    return
  }
  func.func @transform_0(%arg0: i32) -> (i32, i32) {
    %c0_i32 = arith.constant 0 : i32
    %c0_i32_0 = arith.constant 0 : i32
    %c0_i32_1 = arith.constant 0 : i32
    return %c0_i32, %c0_i32_0 : i32, i32
  }
  func.func @transform_1(%arg0: i32) -> i32 {
    %c0_i32 = arith.constant 0 : i32
    %c0_i32_0 = arith.constant 0 : i32
    return %c0_i32 : i32
  }
  func.func @transform_2(%arg0: i32) -> (i32, i32, i32, i32) {
    %c0_i32 = arith.constant 0 : i32
    %c0_i32_0 = arith.constant 0 : i32
    %c0_i32_1 = arith.constant 0 : i32
    %c0_i32_2 = arith.constant 0 : i32
    return %arg0, %c0_i32, %c0_i32_0, %c0_i32_1 : i32, i32, i32, i32
  }
  func.func @transform_3(%arg0: i32) -> (i32, i32, i32, i32) {
    %c0_i32 = arith.constant 0 : i32
    %c0_i32_0 = arith.constant 0 : i32
    %c0_i32_1 = arith.constant 0 : i32
    %c0_i32_2 = arith.constant 0 : i32
    return %arg0, %c0_i32, %c0_i32_0, %c0_i32_1 : i32, i32, i32, i32
  }
}

</mosaic_0001>

<llo_original>
// kernel: conv1x1_pad1_hardswish.1
$region0: #{conv1x1_pad1_hardswish.1}
  #allocation0 [shape = 'u32[]', space=smem, size = 0x4, offset = 0x4, fixed_abs, tag = 'smem constant byte address 0x4 - core index']
  #allocation1 [shape = 'u32[144,128]{1,0:T(1,128)}', space=vmem, size = 0x12000, scoped, tag = 'internal scratch']
  #allocation2 [shape = 'f32[3,66,66]{2,1,0:T(8,128)}', space=vmem, size = 0x1b000, scoped, tag = 'scratch operand']
  %s0 = inlined_call_operand.vmem [shape: f32[3,3], index: 0, kind: input, shape index: {}]
  %s1 = inlined_call_operand.vmem [shape: f32[3], index: 1, kind: input, shape index: {}]
  %s2 = inlined_call_operand.hbm [shape: f32[2,3,64,64], index: 2, kind: input, shape index: {}]
  %s3 = inlined_call_operand.vmem [shape: f32[2,3,66,66], index: 3, kind: output, shape index: {}]
  %s4 = sld [smem:[#allocation0]]
  $region57: #{conv1x1_pad1_hardswish.1} parent=0
    _
  %s6 = ssub.s32 1, %s4
  %s7 = scalar_select 0, %s6, %s4
  $region1: #{conv1x1_pad1_hardswish.1} parent=0
    #allocation3 [shape = 'u8[2048]{0}', space=smem, size = 0x800, scoped, tag = 'input window, operand 0, single buffered']
    #allocation4 [shape = 's32[2]{0}', space=sflag, size = 0x8, scoped, tag = 'scoped memory for conv1x1_pad1_hardswish.1']
    #allocation5 [shape = 's32[2]{0}', space=sflag, size = 0x8, scoped, tag = 'scoped memory for conv1x1_pad1_hardswish.1']
    #allocation6 [shape = 'u8[512]{0}', space=smem, size = 0x200, scoped, tag = 'input window, operand 1, single buffered']
    #allocation7 [shape = 's32[1]{0}', space=sflag, size = 0x4, scoped, tag = 'scoped memory for conv1x1_pad1_hardswish.1']
    #allocation8 [shape = 'u8[196608]{0}', space=vmem, size = 0x30000, scoped, tag = 'input window, operand 2']
    %8 = vsyncpa [#allocation5], 0
    %9 = vsyncpa [#allocation7], 0
    %10 = vsyncpa [#allocation4], 0
    %s11 = scalar_lea.sflag [#allocation4], 1
    %12 = vsyncpa %s11, 0
    loop: start=0, step=1, limit=4
    $region2: #{conv1x1_pad1_hardswish.1} parent=1 // loop_pre_header
      _
    $region3: #{conv1x1_pad1_hardswish.1} parent=1 // loop_header
      %s14 = sphi 0, %s18
      %p15 = scmp.ge.s32.totalorder %s14, 4
      %s22 = sphi 0, %s22
      %s24 = sphi 0, %s22
      %s25 = sphi 0, %s24
      %s39 = sphi 0, %s25
      %s43 = sphi 0, %s43
      %s45 = sphi 0, %s43
      %s46 = sphi 0, %s45
      %s60 = sphi 0, %s46
      %s66 = sphi 0, %s68
      %s69 = sphi 0, %s66
      %s70 = sphi 0, %s69
      %s86 = sphi 0, %s70
      %s92 = sphi 0, %s94
      %s95 = sphi 0, %s92
      %s96 = sphi 0, %s95
      %s112 = sphi 0, %s96
    $region4: #{conv1x1_pad1_hardswish.1} parent=1 // loop_header_branch
      %17 = sbr.rel (%p15) target = $region8
    $region5: #{conv1x1_pad1_hardswish.1} parent=1 // loop_body
      %s19 = ssub.s32 %s14, 1
      %s20 = ssub.s32 %s14, 2
      %s21 = sadd.s32 %s14, 1
      %s23 = sadd.s32 %s22, 1
      %p26 = scmp.eq.s32.totalorder %s14, 1
      %p27 = scmp.ne.s32.totalorder %s22, %s24
      %p28 = scmp.eq.s32.totalorder %s14, 0
      %p29 = por %p27, %p28
      %p30 = scmp.ne.s32.totalorder %s22, %s24
      %p31 = scmp.eq.s32.totalorder %s19, 1
      %p32 = por %p30, %p31
      %p33 = scmp.ne.s32.totalorder %s24, %s25
      %p34 = scmp.eq.s32.totalorder %s19, 0
      %p35 = por %p33, %p34
      %p36 = scmp.ne.s32.totalorder %s24, %s25
      %p37 = scmp.eq.s32.totalorder %s20, 1
      %p38 = por %p36, %p37
      %p40 = scmp.ne.s32.totalorder %s25, %s39
      %p41 = scmp.eq.s32.totalorder %s20, 0
      %p42 = por %p40, %p41
      %s44 = sadd.s32 %s43, 1
      %p47 = scmp.eq.s32.totalorder %s14, 1
      %p48 = scmp.ne.s32.totalorder %s43, %s45
      %p49 = scmp.eq.s32.totalorder %s14, 0
      %p50 = por %p48, %p49
      %p51 = scmp.ne.s32.totalorder %s43, %s45
      %p52 = scmp.eq.s32.totalorder %s19, 1
      %p53 = por %p51, %p52
      %p54 = scmp.ne.s32.totalorder %s45, %s46
      %p55 = scmp.eq.s32.totalorder %s19, 0
      %p56 = por %p54, %p55
      %p57 = scmp.ne.s32.totalorder %s45, %s46
      %p58 = scmp.eq.s32.totalorder %s20, 1
      %p59 = por %p57, %p58
      %p61 = scmp.ne.s32.totalorder %s46, %s60
      %p62 = scmp.eq.s32.totalorder %s20, 0
      %p63 = por %p61, %p62
      %s64 = ssub.s32 %s14, %s21
      %p65 = scmp.eq.s32.totalorder %s64, 0
      %s67 = sadd.s32 %s66, 1
      %s68 = scalar_select %p65, %s66, %s67
      %p71 = pneg %p65
      %p72 = scmp.eq.s32.totalorder %s14, 1
      %p73 = por %p71, %p72
      %p74 = scmp.ne.s32.totalorder %s66, %s69
      %p75 = scmp.eq.s32.totalorder %s14, 0
      %p76 = por %p74, %p75
      %p77 = scmp.ne.s32.totalorder %s66, %s69
      %p78 = scmp.eq.s32.totalorder %s19, 1
      %p79 = por %p77, %p78
      %p80 = scmp.ne.s32.totalorder %s69, %s70
      %p81 = scmp.eq.s32.totalorder %s19, 0
      %p82 = por %p80, %p81
      %p83 = scmp.ne.s32.totalorder %s69, %s70
      %p84 = scmp.eq.s32.totalorder %s20, 1
      %p85 = por %p83, %p84
      %p87 = scmp.ne.s32.totalorder %s70, %s86
      %p88 = scmp.eq.s32.totalorder %s20, 0
      %p89 = por %p87, %p88
      %s90 = ssub.s32 %s14, %s21
      %p91 = scmp.eq.s32.totalorder %s90, 0
      %s93 = sadd.s32 %s92, 1
      %s94 = scalar_select %p91, %s92, %s93
      %p97 = pneg %p91
      %p98 = scmp.eq.s32.totalorder %s14, 1
      %p99 = por %p97, %p98
      %p100 = scmp.ne.s32.totalorder %s92, %s95
      %p101 = scmp.eq.s32.totalorder %s14, 0
      %p102 = por %p100, %p101
      %p103 = scmp.ne.s32.totalorder %s92, %s95
      %p104 = scmp.eq.s32.totalorder %s19, 1
      %p105 = por %p103, %p104
      %p106 = scmp.ne.s32.totalorder %s95, %s96
      %p107 = scmp.eq.s32.totalorder %s19, 0
      %p108 = por %p106, %p107
      %p109 = scmp.ne.s32.totalorder %s95, %s96
      %p110 = scmp.eq.s32.totalorder %s20, 1
      %p111 = por %p109, %p110
      %p113 = scmp.ne.s32.totalorder %s96, %s112
      %p114 = scmp.eq.s32.totalorder %s20, 0
      %p115 = por %p113, %p114
      %p116 = scmp.le.s32.totalorder 1, %s14
      %p117 = scmp.lt.s32.totalorder %s14, 3
      %p118 = pnand %p116, %p117
      %p119 = pneg %p118
      // Predicated region
      $region9: #{conv1x1_pad1_hardswish.1} parent=5 // pred_check
        _
      $region10: #{conv1x1_pad1_hardswish.1} parent=5 // pred_check_branch
        %121 = sbr.rel (%p118) target = $region12
      $region11: #{conv1x1_pad1_hardswish.1} parent=5 // pred_region
        %s122 = ssub.s32 %s14, 1
        // Predicated region
        $region13: #{conv1x1_pad1_hardswish.1} parent=11 // pred_check
          %p123 = pneg %p35
        $region14: #{conv1x1_pad1_hardswish.1} parent=11 // pred_check_branch
          %125 = sbr.rel (%p123) target = $region16
        $region15: #{conv1x1_pad1_hardswish.1} parent=11 // pred_region
          %s127 = ssub.s32 64, 64
          %128 = vsyncadd [#allocation5], %s127
          %s130 = sshll.u32 %s0, 4
          %s131 = int_to_ptr.vmem [resolvable:$true] %s130
          %133 = dma.vmem_to_smem %s131, 64, [#allocation3], [#allocation5]
        $region16: #{conv1x1_pad1_hardswish.1} parent=11 // pred_fallthru
          _
        // Predicated region
        $region17: #{conv1x1_pad1_hardswish.1} parent=11 // pred_check
          %p134 = pneg %p56
        $region18: #{conv1x1_pad1_hardswish.1} parent=11 // pred_check_branch
          %136 = sbr.rel (%p134) target = $region20
        $region19: #{conv1x1_pad1_hardswish.1} parent=11 // pred_region
          %s138 = ssub.s32 16, 16
          %139 = vsyncadd [#allocation7], %s138
          %s141 = sshll.u32 %s1, 4
          %s142 = int_to_ptr.vmem [resolvable:$true] %s141
          %144 = dma.vmem_to_smem %s142, 16, [#allocation6], [#allocation7]
        $region20: #{conv1x1_pad1_hardswish.1} parent=11 // pred_fallthru
          _
      $region12: #{conv1x1_pad1_hardswish.1} parent=5 // pred_fallthru
        _
      %p145 = scmp.lt.s32.totalorder %s14, 2
      // Predicated region
      $region21: #{conv1x1_pad1_hardswish.1} parent=5 // pred_check
        %p146 = pneg %p145
      $region22: #{conv1x1_pad1_hardswish.1} parent=5 // pred_check_branch
        %148 = sbr.rel (%p146) target = $region24
      $region23: #{conv1x1_pad1_hardswish.1} parent=5 // pred_region
        // Predicated region
        $region25: #{conv1x1_pad1_hardswish.1} parent=23 // pred_check
          %p149 = pneg %p76
        $region26: #{conv1x1_pad1_hardswish.1} parent=23 // pred_check_branch
          %151 = sbr.rel (%p149) target = $region28
        $region27: #{conv1x1_pad1_hardswish.1} parent=23 // pred_region
          %s152 = sand.u32 %s66, 1
          %s153 = scalar_lea.sflag [#allocation4], %s152
          %s154 = sand.u32 %s66, 1
          %s155 = smul.addr %s154, 192
          %s156 = scalar_lea.vmem [#allocation8], %s155
          %s158 = ssub.s32 3072, 3072
          %159 = vsyncadd %s153, %s158
          %s160 = smul.addr %s14, 24
          %s161 = smul.addr %s160, 128
          %s162 = scalar_lea.hbm %s2, %s161
          %s163 = sshll.u32 %s156, 4
          %s164 = int_to_ptr.vmem [resolvable:$true] %s163
          %169 = dma.hbm_to_vmem [thread:$0]  %s162, 3072, %s164, %s153, 128, 128, 8
        $region28: #{conv1x1_pad1_hardswish.1} parent=23 // pred_fallthru
          _
      $region24: #{conv1x1_pad1_hardswish.1} parent=5 // pred_fallthru
        _
      %p170 = scmp.le.s32.totalorder 1, %s14
      %p171 = scmp.lt.s32.totalorder %s14, 3
      %p172 = pnand %p170, %p171
      %p173 = pneg %p172
      // Predicated region
      $region29: #{conv1x1_pad1_hardswish.1} parent=5 // pred_check
        _
      $region30: #{conv1x1_pad1_hardswish.1} parent=5 // pred_check_branch
        %175 = sbr.rel (%p172) target = $region32
      $region31: #{conv1x1_pad1_hardswish.1} parent=5 // pred_region
        %s176 = ssub.s32 %s14, 1
        // Predicated region
        $region33: #{conv1x1_pad1_hardswish.1} parent=31 // pred_check
          %p177 = pneg %p35
        $region34: #{conv1x1_pad1_hardswish.1} parent=31 // pred_check_branch
          %179 = sbr.rel (%p177) target = $region36
        $region35: #{conv1x1_pad1_hardswish.1} parent=31 // pred_region
          %180 = dma.done [#allocation5], 64
        $region36: #{conv1x1_pad1_hardswish.1} parent=31 // pred_fallthru
          _
        // Predicated region
        $region37: #{conv1x1_pad1_hardswish.1} parent=31 // pred_check
          %p181 = pneg %p56
        $region38: #{conv1x1_pad1_hardswish.1} parent=31 // pred_check_branch
          %183 = sbr.rel (%p181) target = $region40
        $region39: #{conv1x1_pad1_hardswish.1} parent=31 // pred_region
          %184 = dma.done [#allocation7], 16
        $region40: #{conv1x1_pad1_hardswish.1} parent=31 // pred_fallthru
          _
        %s185 = sand.u32 %s69, 1
        %s186 = scalar_lea.sflag [#allocation4], %s185
        %s187 = sand.u32 %s69, 1
        %s188 = smul.addr %s187, 192
        %s189 = scalar_lea.vmem [#allocation8], %s188
        // Predicated region
        $region41: #{conv1x1_pad1_hardswish.1} parent=31 // pred_check
          %p190 = pneg %p82
        $region42: #{conv1x1_pad1_hardswish.1} parent=31 // pred_check_branch
          %192 = sbr.rel (%p190) target = $region44
        $region43: #{conv1x1_pad1_hardswish.1} parent=31 // pred_region
          %193 = dma.done %s186, 3072
        $region44: #{conv1x1_pad1_hardswish.1} parent=31 // pred_fallthru
          _
        %194 = sfence
        %p195 = pneg %p35
        %p196 = pneg %p32
        %p197 = pneg %p56
        %p198 = pneg %p53
        %s199 = sand.u32 %s69, 1
        %s200 = scalar_lea.sflag [#allocation4], %s199
        %s201 = sand.u32 %s69, 1
        %s202 = smul.addr %s201, 192
        %s203 = scalar_lea.vmem [#allocation8], %s202
        %p204 = pneg %p82
        %p205 = pneg %p79
        %p206 = pneg %p108
        %p207 = pneg %p105
        %p208 = scmp.lt.s32.totalorder %s19, 1
        %s209 = scalar_select %p208, %s19, 1
        %s210 = smul.addr %s209, 27
        %s211 = smul.addr %s210, 8
        %s212 = scalar_lea.vmem %s3, %s211
        %p213 = scmp.lt.s32.totalorder %s19, 1
        %s214 = scalar_select %p213, %s19, 1
        %s215 = smul.addr %s214, 27
        %s216 = smul.addr %s215, 8
        %s217 = scalar_lea.vmem %s3, %s216
        %vm218 = vcmask 539648
        %219 = vst.msk [vmem:[#allocation2] sm:$0xff] %vm218, 0.0
        %220 = vst.msk [vmem:[#allocation2 + $0x8] sm:$0xff] %vm218, 0.0
        %221 = vst.msk [vmem:[#allocation2 + $0x10] sm:$0xff] %vm218, 0.0
        %222 = vst.msk [vmem:[#allocation2 + $0x18] sm:$0xff] %vm218, 0.0
        %223 = vst.msk [vmem:[#allocation2 + $0x20] sm:$0xff] %vm218, 0.0
        %224 = vst.msk [vmem:[#allocation2 + $0x28] sm:$0xff] %vm218, 0.0
        %225 = vst.msk [vmem:[#allocation2 + $0x30] sm:$0xff] %vm218, 0.0
        %226 = vst.msk [vmem:[#allocation2 + $0x38] sm:$0xff] %vm218, 0.0
        %vm227 = vcmask 533504
        %228 = vst.msk [vmem:[#allocation2 + $0x40] sm:$0x3] %vm227, 0.0
        %229 = vst.msk [vmem:[#allocation2 + $0x48] sm:$0xff] %vm218, 0.0
        %230 = vst.msk [vmem:[#allocation2 + $0x50] sm:$0xff] %vm218, 0.0
        %231 = vst.msk [vmem:[#allocation2 + $0x58] sm:$0xff] %vm218, 0.0
        %232 = vst.msk [vmem:[#allocation2 + $0x60] sm:$0xff] %vm218, 0.0
        %233 = vst.msk [vmem:[#allocation2 + $0x68] sm:$0xff] %vm218, 0.0
        %234 = vst.msk [vmem:[#allocation2 + $0x70] sm:$0xff] %vm218, 0.0
        %235 = vst.msk [vmem:[#allocation2 + $0x78] sm:$0xff] %vm218, 0.0
        %236 = vst.msk [vmem:[#allocation2 + $0x80] sm:$0xff] %vm218, 0.0
        %237 = vst.msk [vmem:[#allocation2 + $0x88] sm:$0x3] %vm227, 0.0
        %238 = vst.msk [vmem:[#allocation2 + $0x90] sm:$0xff] %vm218, 0.0
        %239 = vst.msk [vmem:[#allocation2 + $0x98] sm:$0xff] %vm218, 0.0
        %240 = vst.msk [vmem:[#allocation2 + $0xa0] sm:$0xff] %vm218, 0.0
        %241 = vst.msk [vmem:[#allocation2 + $0xa8] sm:$0xff] %vm218, 0.0
        %242 = vst.msk [vmem:[#allocation2 + $0xb0] sm:$0xff] %vm218, 0.0
        %243 = vst.msk [vmem:[#allocation2 + $0xb8] sm:$0xff] %vm218, 0.0
        %244 = vst.msk [vmem:[#allocation2 + $0xc0] sm:$0xff] %vm218, 0.0
        %245 = vst.msk [vmem:[#allocation2 + $0xc8] sm:$0xff] %vm218, 0.0
        %246 = vst.msk [vmem:[#allocation2 + $0xd0] sm:$0x3] %vm227, 0.0
        %v247 = vld [vmem:[%s189] sm:$0xff]
        %v248 = vld [vmem:[%s189 + $0x8] sm:$0xff]
        %v249 = vld [vmem:[%s189 + $0x10] sm:$0xff]
        %v250 = vld [vmem:[%s189 + $0x18] sm:$0xff]
        %v251 = vld [vmem:[%s189 + $0x20] sm:$0xff]
        %v252 = vld [vmem:[%s189 + $0x28] sm:$0xff]
        %v253 = vld [vmem:[%s189 + $0x30] sm:$0xff]
        %v254 = vld [vmem:[%s189 + $0x38] sm:$0xff]
        %v255 = vld [vmem:[%s189 + $0x40] sm:$0xff]
        %v256 = vld [vmem:[%s189 + $0x48] sm:$0xff]
        %v257 = vld [vmem:[%s189 + $0x50] sm:$0xff]
        %v258 = vld [vmem:[%s189 + $0x58] sm:$0xff]
        %v259 = vld [vmem:[%s189 + $0x60] sm:$0xff]
        %v260 = vld [vmem:[%s189 + $0x68] sm:$0xff]
        %v261 = vld [vmem:[%s189 + $0x70] sm:$0xff]
        %v262 = vld [vmem:[%s189 + $0x78] sm:$0xff]
        %v263 = vld [vmem:[%s189 + $0x80] sm:$0xff]
        %v264 = vld [vmem:[%s189 + $0x88] sm:$0xff]
        %v265 = vld [vmem:[%s189 + $0x90] sm:$0xff]
        %v266 = vld [vmem:[%s189 + $0x98] sm:$0xff]
        %v267 = vld [vmem:[%s189 + $0xa0] sm:$0xff]
        %v268 = vld [vmem:[%s189 + $0xa8] sm:$0xff]
        %v269 = vld [vmem:[%s189 + $0xb0] sm:$0xff]
        %v270 = vld [vmem:[%s189 + $0xb8] sm:$0xff]
        %295 = vrot.lane.b32.xlu0 %v247, 1
        %v296 = vpop.permute.xlu0 %295
        %297 = vrot.lane.b32.xlu0 %v248, 1
        %v298 = vpop.permute.xlu0 %297
        %299 = vrot.lane.b32.xlu0 %v249, 1
        %v300 = vpop.permute.xlu0 %299
        %301 = vrot.lane.b32.xlu0 %v250, 1
        %v302 = vpop.permute.xlu0 %301
        %303 = vrot.lane.b32.xlu0 %v251, 1
        %v304 = vpop.permute.xlu0 %303
        %305 = vrot.lane.b32.xlu0 %v252, 1
        %v306 = vpop.permute.xlu0 %305
        %307 = vrot.lane.b32.xlu0 %v253, 1
        %v308 = vpop.permute.xlu0 %307
        %309 = vrot.lane.b32.xlu0 %v254, 1
        %v310 = vpop.permute.xlu0 %309
        %311 = vrot.lane.b32.xlu0 %v255, 1
        %v312 = vpop.permute.xlu0 %311
        %313 = vrot.lane.b32.xlu0 %v256, 1
        %v314 = vpop.permute.xlu0 %313
        %315 = vrot.lane.b32.xlu0 %v257, 1
        %v316 = vpop.permute.xlu0 %315
        %317 = vrot.lane.b32.xlu0 %v258, 1
        %v318 = vpop.permute.xlu0 %317
        %319 = vrot.lane.b32.xlu0 %v259, 1
        %v320 = vpop.permute.xlu0 %319
        %321 = vrot.lane.b32.xlu0 %v260, 1
        %v322 = vpop.permute.xlu0 %321
        %323 = vrot.lane.b32.xlu0 %v261, 1
        %v324 = vpop.permute.xlu0 %323
        %325 = vrot.lane.b32.xlu0 %v262, 1
        %v326 = vpop.permute.xlu0 %325
        %327 = vrot.lane.b32.xlu0 %v263, 1
        %v328 = vpop.permute.xlu0 %327
        %329 = vrot.lane.b32.xlu0 %v264, 1
        %v330 = vpop.permute.xlu0 %329
        %331 = vrot.lane.b32.xlu0 %v265, 1
        %v332 = vpop.permute.xlu0 %331
        %333 = vrot.lane.b32.xlu0 %v266, 1
        %v334 = vpop.permute.xlu0 %333
        %335 = vrot.lane.b32.xlu0 %v267, 1
        %v336 = vpop.permute.xlu0 %335
        %337 = vrot.lane.b32.xlu0 %v268, 1
        %v338 = vpop.permute.xlu0 %337
        %339 = vrot.lane.b32.xlu0 %v269, 1
        %v340 = vpop.permute.xlu0 %339
        %341 = vrot.lane.b32.xlu0 %v270, 1
        %v342 = vpop.permute.xlu0 %341
        %vm367 = vcmask 531464
        %368 = vst.msk [vmem:[#allocation2 + $0x1] sm:$0xff] %vm367, %v296
        %369 = vst.msk [vmem:[#allocation2 + $0x9] sm:$0xff] %vm367, %v298
        %370 = vst.msk [vmem:[#allocation2 + $0x11] sm:$0xff] %vm367, %v300
        %371 = vst.msk [vmem:[#allocation2 + $0x19] sm:$0xff] %vm367, %v302
        %372 = vst.msk [vmem:[#allocation2 + $0x21] sm:$0xff] %vm367, %v304
        %373 = vst.msk [vmem:[#allocation2 + $0x29] sm:$0xff] %vm367, %v306
        %374 = vst.msk [vmem:[#allocation2 + $0x31] sm:$0xff] %vm367, %v308
        %375 = vst.msk [vmem:[#allocation2 + $0x39] sm:$0xff] %vm367, %v310
        %376 = vst.msk [vmem:[#allocation2 + $0x49] sm:$0xff] %vm367, %v312
        %377 = vst.msk [vmem:[#allocation2 + $0x51] sm:$0xff] %vm367, %v314
        %378 = vst.msk [vmem:[#allocation2 + $0x59] sm:$0xff] %vm367, %v316
        %379 = vst.msk [vmem:[#allocation2 + $0x61] sm:$0xff] %vm367, %v318
        %380 = vst.msk [vmem:[#allocation2 + $0x69] sm:$0xff] %vm367, %v320
        %381 = vst.msk [vmem:[#allocation2 + $0x71] sm:$0xff] %vm367, %v322
        %382 = vst.msk [vmem:[#allocation2 + $0x79] sm:$0xff] %vm367, %v324
        %383 = vst.msk [vmem:[#allocation2 + $0x81] sm:$0xff] %vm367, %v326
        %384 = vst.msk [vmem:[#allocation2 + $0x91] sm:$0xff] %vm367, %v328
        %385 = vst.msk [vmem:[#allocation2 + $0x99] sm:$0xff] %vm367, %v330
        %386 = vst.msk [vmem:[#allocation2 + $0xa1] sm:$0xff] %vm367, %v332
        %387 = vst.msk [vmem:[#allocation2 + $0xa9] sm:$0xff] %vm367, %v334
        %388 = vst.msk [vmem:[#allocation2 + $0xb1] sm:$0xff] %vm367, %v336
        %389 = vst.msk [vmem:[#allocation2 + $0xb9] sm:$0xff] %vm367, %v338
        %390 = vst.msk [vmem:[#allocation2 + $0xc1] sm:$0xff] %vm367, %v340
        %391 = vst.msk [vmem:[#allocation2 + $0xc9] sm:$0xff] %vm367, %v342
        %s392 = sld [smem:[#allocation3]]
        %v393 = vld [vmem:[#allocation2] sm:$0xff]
        %v394 = vld [vmem:[#allocation2 + $0x8] sm:$0xff]
        %v395 = vld [vmem:[#allocation2 + $0x10] sm:$0xff]
        %v396 = vld [vmem:[#allocation2 + $0x18] sm:$0xff]
        %v397 = vld [vmem:[#allocation2 + $0x20] sm:$0xff]
        %v398 = vld [vmem:[#allocation2 + $0x28] sm:$0xff]
        %v399 = vld [vmem:[#allocation2 + $0x30] sm:$0xff]
        %v400 = vld [vmem:[#allocation2 + $0x38] sm:$0xff]
        %v401 = vld [vmem:[#allocation2 + $0x40] sm:$0x3]
        %v402 = vstv %s392
        %v403 = vmul.f32 %v402, %v393
        %v404 = vmul.f32 %v402, %v394
        %v405 = vmul.f32 %v402, %v395
        %v406 = vmul.f32 %v402, %v396
        %v407 = vmul.f32 %v402, %v397
        %v408 = vmul.f32 %v402, %v398
        %v409 = vmul.f32 %v402, %v399
        %v410 = vmul.f32 %v402, %v400
        %v411 = vmul.f32 %v402, %v401
        %s412 = sld [smem:[#allocation3 + $0x1]]
        %s413 = scalar_lea.vmem [#allocation2], 72
        %v414 = vld [vmem:[%s413] sm:$0xff]
        %v415 = vld [vmem:[%s413 + $0x8] sm:$0xff]
        %v416 = vld [vmem:[%s413 + $0x10] sm:$0xff]
        %v417 = vld [vmem:[%s413 + $0x18] sm:$0xff]
        %v418 = vld [vmem:[%s413 + $0x20] sm:$0xff]
        %v419 = vld [vmem:[%s413 + $0x28] sm:$0xff]
        %v420 = vld [vmem:[%s413 + $0x30] sm:$0xff]
        %v421 = vld [vmem:[%s413 + $0x38] sm:$0xff]
        %v422 = vld [vmem:[%s413 + $0x40] sm:$0x3]
        %v423 = vstv %s412
        %v424 = vmul.f32 %v423, %v414
        %v425 = vmul.f32 %v423, %v415
        %v426 = vmul.f32 %v423, %v416
        %v427 = vmul.f32 %v423, %v417
        %v428 = vmul.f32 %v423, %v418
        %v429 = vmul.f32 %v423, %v419
        %v430 = vmul.f32 %v423, %v420
        %v431 = vmul.f32 %v423, %v421
        %v432 = vmul.f32 %v423, %v422
        %v433 = vadd.f32 %v403, %v424
        %v434 = vadd.f32 %v404, %v425
        %v435 = vadd.f32 %v405, %v426
        %v436 = vadd.f32 %v406, %v427
        %v437 = vadd.f32 %v407, %v428
        %v438 = vadd.f32 %v408, %v429
        %v439 = vadd.f32 %v409, %v430
        %v440 = vadd.f32 %v410, %v431
        %v441 = vadd.f32 %v411, %v432
        %s442 = sld [smem:[#allocation3 + $0x2]]
        %s443 = scalar_lea.vmem [#allocation2], 144
        %v444 = vld [vmem:[%s443] sm:$0xff]
        %v445 = vld [vmem:[%s443 + $0x8] sm:$0xff]
        %v446 = vld [vmem:[%s443 + $0x10] sm:$0xff]
        %v447 = vld [vmem:[%s443 + $0x18] sm:$0xff]
        %v448 = vld [vmem:[%s443 + $0x20] sm:$0xff]
        %v449 = vld [vmem:[%s443 + $0x28] sm:$0xff]
        %v450 = vld [vmem:[%s443 + $0x30] sm:$0xff]
        %v451 = vld [vmem:[%s443 + $0x38] sm:$0xff]
        %v452 = vld [vmem:[%s443 + $0x40] sm:$0x3]
        %v453 = vstv %s442
        %v454 = vmul.f32 %v453, %v444
        %v455 = vmul.f32 %v453, %v445
        %v456 = vmul.f32 %v453, %v446
        %v457 = vmul.f32 %v453, %v447
        %v458 = vmul.f32 %v453, %v448
        %v459 = vmul.f32 %v453, %v449
        %v460 = vmul.f32 %v453, %v450
        %v461 = vmul.f32 %v453, %v451
        %v462 = vmul.f32 %v453, %v452
        %v463 = vadd.f32 %v433, %v454
        %v464 = vadd.f32 %v434, %v455
        %v465 = vadd.f32 %v435, %v456
        %v466 = vadd.f32 %v436, %v457
        %v467 = vadd.f32 %v437, %v458
        %v468 = vadd.f32 %v438, %v459
        %v469 = vadd.f32 %v439, %v460
        %v470 = vadd.f32 %v440, %v461
        %v471 = vadd.f32 %v441, %v462
        %s472 = sld [smem:[#allocation6]]
        %v473 = vstv %s472
        %v474 = vadd.f32 %v463, %v473
        %v475 = vadd.f32 %v464, %v473
        %v476 = vadd.f32 %v465, %v473
        %v477 = vadd.f32 %v466, %v473
        %v478 = vadd.f32 %v467, %v473
        %v479 = vadd.f32 %v468, %v473
        %v480 = vadd.f32 %v469, %v473
        %v481 = vadd.f32 %v470, %v473
        %v482 = vadd.f32 %v471, %v473
        %v483 = vadd.f32 %v474, 3.0
        %v484 = vadd.f32 %v475, 3.0
        %v485 = vadd.f32 %v476, 3.0
        %v486 = vadd.f32 %v477, 3.0
        %v487 = vadd.f32 %v478, 3.0
        %v488 = vadd.f32 %v479, 3.0
        %v489 = vadd.f32 %v480, 3.0
        %v490 = vadd.f32 %v481, 3.0
        %v491 = vadd.f32 %v482, 3.0
        %v492 = vmax.f32 %v483, 0.0
        %v493 = vmax.f32 %v484, 0.0
        %v494 = vmax.f32 %v485, 0.0
        %v495 = vmax.f32 %v486, 0.0
        %v496 = vmax.f32 %v487, 0.0
        %v497 = vmax.f32 %v488, 0.0
        %v498 = vmax.f32 %v489, 0.0
        %v499 = vmax.f32 %v490, 0.0
        %v500 = vmax.f32 %v491, 0.0
        %v501 = vmin.f32 %v492, 6.0
        %v502 = vmin.f32 %v493, 6.0
        %v503 = vmin.f32 %v494, 6.0
        %v504 = vmin.f32 %v495, 6.0
        %v505 = vmin.f32 %v496, 6.0
        %v506 = vmin.f32 %v497, 6.0
        %v507 = vmin.f32 %v498, 6.0
        %v508 = vmin.f32 %v499, 6.0
        %v509 = vmin.f32 %v500, 6.0
        %v510 = vmul.f32 %v474, %v501
        %v511 = vmul.f32 %v475, %v502
        %v512 = vmul.f32 %v476, %v503
        %v513 = vmul.f32 %v477, %v504
        %v514 = vmul.f32 %v478, %v505
        %v515 = vmul.f32 %v479, %v506
        %v516 = vmul.f32 %v480, %v507
        %v517 = vmul.f32 %v481, %v508
        %v518 = vmul.f32 %v482, %v509
        %v519 = vmul.f32 %v510, 0.16666667
        %v520 = vmul.f32 %v511, 0.16666667
        %v521 = vmul.f32 %v512, 0.16666667
        %v522 = vmul.f32 %v513, 0.16666667
        %v523 = vmul.f32 %v514, 0.16666667
        %v524 = vmul.f32 %v515, 0.16666667
        %v525 = vmul.f32 %v516, 0.16666667
        %v526 = vmul.f32 %v517, 0.16666667
        %v527 = vmul.f32 %v518, 0.16666667
        %528 = vst.msk [vmem:[%s217] sm:$0xff] %vm218, %v519
        %529 = vst.msk [vmem:[%s217 + $0x8] sm:$0xff] %vm218, %v520
        %530 = vst.msk [vmem:[%s217 + $0x10] sm:$0xff] %vm218, %v521
        %531 = vst.msk [vmem:[%s217 + $0x18] sm:$0xff] %vm218, %v522
        %532 = vst.msk [vmem:[%s217 + $0x20] sm:$0xff] %vm218, %v523
        %533 = vst.msk [vmem:[%s217 + $0x28] sm:$0xff] %vm218, %v524
        %534 = vst.msk [vmem:[%s217 + $0x30] sm:$0xff] %vm218, %v525
        %535 = vst.msk [vmem:[%s217 + $0x38] sm:$0xff] %vm218, %v526
        %536 = vst.msk [vmem:[%s217 + $0x40] sm:$0x3] %vm227, %v527
        %s537 = sld [smem:[#allocation3 + $0x80]]
        %v538 = vld [vmem:[#allocation2] sm:$0xff]
        %v539 = vld [vmem:[#allocation2 + $0x8] sm:$0xff]
        %v540 = vld [vmem:[#allocation2 + $0x10] sm:$0xff]
        %v541 = vld [vmem:[#allocation2 + $0x18] sm:$0xff]
        %v542 = vld [vmem:[#allocation2 + $0x20] sm:$0xff]
        %v543 = vld [vmem:[#allocation2 + $0x28] sm:$0xff]
        %v544 = vld [vmem:[#allocation2 + $0x30] sm:$0xff]
        %v545 = vld [vmem:[#allocation2 + $0x38] sm:$0xff]
        %v546 = vld [vmem:[#allocation2 + $0x40] sm:$0x3]
        %v547 = vstv %s537
        %v548 = vmul.f32 %v547, %v538
        %v549 = vmul.f32 %v547, %v539
        %v550 = vmul.f32 %v547, %v540
        %v551 = vmul.f32 %v547, %v541
        %v552 = vmul.f32 %v547, %v542
        %v553 = vmul.f32 %v547, %v543
        %v554 = vmul.f32 %v547, %v544
        %v555 = vmul.f32 %v547, %v545
        %v556 = vmul.f32 %v547, %v546
        %s557 = sld [smem:[#allocation3 + $0x81]]
        %v558 = vld [vmem:[%s413] sm:$0xff]
        %v559 = vld [vmem:[%s413 + $0x8] sm:$0xff]
        %v560 = vld [vmem:[%s413 + $0x10] sm:$0xff]
        %v561 = vld [vmem:[%s413 + $0x18] sm:$0xff]
        %v562 = vld [vmem:[%s413 + $0x20] sm:$0xff]
        %v563 = vld [vmem:[%s413 + $0x28] sm:$0xff]
        %v564 = vld [vmem:[%s413 + $0x30] sm:$0xff]
        %v565 = vld [vmem:[%s413 + $0x38] sm:$0xff]
        %v566 = vld [vmem:[%s413 + $0x40] sm:$0x3]
        %v567 = vstv %s557
        %v568 = vmul.f32 %v567, %v558
        %v569 = vmul.f32 %v567, %v559
        %v570 = vmul.f32 %v567, %v560
        %v571 = vmul.f32 %v567, %v561
        %v572 = vmul.f32 %v567, %v562
        %v573 = vmul.f32 %v567, %v563
        %v574 = vmul.f32 %v567, %v564
        %v575 = vmul.f32 %v567, %v565
        %v576 = vmul.f32 %v567, %v566
        %v577 = vadd.f32 %v548, %v568
        %v578 = vadd.f32 %v549, %v569
        %v579 = vadd.f32 %v550, %v570
        %v580 = vadd.f32 %v551, %v571
        %v581 = vadd.f32 %v552, %v572
        %v582 = vadd.f32 %v553, %v573
        %v583 = vadd.f32 %v554, %v574
        %v584 = vadd.f32 %v555, %v575
        %v585 = vadd.f32 %v556, %v576
        %s586 = sld [smem:[#allocation3 + $0x82]]
        %v587 = vld [vmem:[%s443] sm:$0xff]
        %v588 = vld [vmem:[%s443 + $0x8] sm:$0xff]
        %v589 = vld [vmem:[%s443 + $0x10] sm:$0xff]
        %v590 = vld [vmem:[%s443 + $0x18] sm:$0xff]
        %v591 = vld [vmem:[%s443 + $0x20] sm:$0xff]
        %v592 = vld [vmem:[%s443 + $0x28] sm:$0xff]
        %v593 = vld [vmem:[%s443 + $0x30] sm:$0xff]
        %v594 = vld [vmem:[%s443 + $0x38] sm:$0xff]
        %v595 = vld [vmem:[%s443 + $0x40] sm:$0x3]
        %v596 = vstv %s586
        %v597 = vmul.f32 %v596, %v587
        %v598 = vmul.f32 %v596, %v588
        %v599 = vmul.f32 %v596, %v589
        %v600 = vmul.f32 %v596, %v590
        %v601 = vmul.f32 %v596, %v591
        %v602 = vmul.f32 %v596, %v592
        %v603 = vmul.f32 %v596, %v593
        %v604 = vmul.f32 %v596, %v594
        %v605 = vmul.f32 %v596, %v595
        %v606 = vadd.f32 %v577, %v597
        %v607 = vadd.f32 %v578, %v598
        %v608 = vadd.f32 %v579, %v599
        %v609 = vadd.f32 %v580, %v600
        %v610 = vadd.f32 %v581, %v601
        %v611 = vadd.f32 %v582, %v602
        %v612 = vadd.f32 %v583, %v603
        %v613 = vadd.f32 %v584, %v604
        %v614 = vadd.f32 %v585, %v605
        %s615 = sld [smem:[#allocation6 + $0x1]]
        %v616 = vstv %s615
        %v617 = vadd.f32 %v606, %v616
        %v618 = vadd.f32 %v607, %v616
        %v619 = vadd.f32 %v608, %v616
        %v620 = vadd.f32 %v609, %v616
        %v621 = vadd.f32 %v610, %v616
        %v622 = vadd.f32 %v611, %v616
        %v623 = vadd.f32 %v612, %v616
        %v624 = vadd.f32 %v613, %v616
        %v625 = vadd.f32 %v614, %v616
        %v626 = vadd.f32 %v617, 3.0
        %v627 = vadd.f32 %v618, 3.0
        %v628 = vadd.f32 %v619, 3.0
        %v629 = vadd.f32 %v620, 3.0
        %v630 = vadd.f32 %v621, 3.0
        %v631 = vadd.f32 %v622, 3.0
        %v632 = vadd.f32 %v623, 3.0
        %v633 = vadd.f32 %v624, 3.0
        %v634 = vadd.f32 %v625, 3.0
        %v635 = vmax.f32 %v626, 0.0
        %v636 = vmax.f32 %v627, 0.0
        %v637 = vmax.f32 %v628, 0.0
        %v638 = vmax.f32 %v629, 0.0
        %v639 = vmax.f32 %v630, 0.0
        %v640 = vmax.f32 %v631, 0.0
        %v641 = vmax.f32 %v632, 0.0
        %v642 = vmax.f32 %v633, 0.0
        %v643 = vmax.f32 %v634, 0.0
        %v644 = vmin.f32 %v635, 6.0
        %v645 = vmin.f32 %v636, 6.0
        %v646 = vmin.f32 %v637, 6.0
        %v647 = vmin.f32 %v638, 6.0
        %v648 = vmin.f32 %v639, 6.0
        %v649 = vmin.f32 %v640, 6.0
        %v650 = vmin.f32 %v641, 6.0
        %v651 = vmin.f32 %v642, 6.0
        %v652 = vmin.f32 %v643, 6.0
        %v653 = vmul.f32 %v617, %v644
        %v654 = vmul.f32 %v618, %v645
        %v655 = vmul.f32 %v619, %v646
        %v656 = vmul.f32 %v620, %v647
        %v657 = vmul.f32 %v621, %v648
        %v658 = vmul.f32 %v622, %v649
        %v659 = vmul.f32 %v623, %v650
        %v660 = vmul.f32 %v624, %v651
        %v661 = vmul.f32 %v625, %v652
        %v662 = vmul.f32 %v653, 0.16666667
        %v663 = vmul.f32 %v654, 0.16666667
        %v664 = vmul.f32 %v655, 0.16666667
        %v665 = vmul.f32 %v656, 0.16666667
        %v666 = vmul.f32 %v657, 0.16666667
        %v667 = vmul.f32 %v658, 0.16666667
        %v668 = vmul.f32 %v659, 0.16666667
        %v669 = vmul.f32 %v660, 0.16666667
        %v670 = vmul.f32 %v661, 0.16666667
        %s671 = scalar_lea.vmem %s217, 72
        %672 = vst.msk [vmem:[%s671] sm:$0xff] %vm218, %v662
        %673 = vst.msk [vmem:[%s671 + $0x8] sm:$0xff] %vm218, %v663
        %674 = vst.msk [vmem:[%s671 + $0x10] sm:$0xff] %vm218, %v664
        %675 = vst.msk [vmem:[%s671 + $0x18] sm:$0xff] %vm218, %v665
        %676 = vst.msk [vmem:[%s671 + $0x20] sm:$0xff] %vm218, %v666
        %677 = vst.msk [vmem:[%s671 + $0x28] sm:$0xff] %vm218, %v667
        %678 = vst.msk [vmem:[%s671 + $0x30] sm:$0xff] %vm218, %v668
        %679 = vst.msk [vmem:[%s671 + $0x38] sm:$0xff] %vm218, %v669
        %680 = vst.msk [vmem:[%s671 + $0x40] sm:$0x3] %vm227, %v670
        %s681 = sld [smem:[#allocation3 + $0x100]]
        %v682 = vld [vmem:[#allocation2] sm:$0xff]
        %v683 = vld [vmem:[#allocation2 + $0x8] sm:$0xff]
        %v684 = vld [vmem:[#allocation2 + $0x10] sm:$0xff]
        %v685 = vld [vmem:[#allocation2 + $0x18] sm:$0xff]
        %v686 = vld [vmem:[#allocation2 + $0x20] sm:$0xff]
        %v687 = vld [vmem:[#allocation2 + $0x28] sm:$0xff]
        %v688 = vld [vmem:[#allocation2 + $0x30] sm:$0xff]
        %v689 = vld [vmem:[#allocation2 + $0x38] sm:$0xff]
        %v690 = vld [vmem:[#allocation2 + $0x40] sm:$0x3]
        %v691 = vstv %s681
        %v692 = vmul.f32 %v691, %v682
        %v693 = vmul.f32 %v691, %v683
        %v694 = vmul.f32 %v691, %v684
        %v695 = vmul.f32 %v691, %v685
        %v696 = vmul.f32 %v691, %v686
        %v697 = vmul.f32 %v691, %v687
        %v698 = vmul.f32 %v691, %v688
        %v699 = vmul.f32 %v691, %v689
        %v700 = vmul.f32 %v691, %v690
        %s701 = sld [smem:[#allocation3 + $0x101]]
        %v702 = vld [vmem:[%s413] sm:$0xff]
        %v703 = vld [vmem:[%s413 + $0x8] sm:$0xff]
        %v704 = vld [vmem:[%s413 + $0x10] sm:$0xff]
        %v705 = vld [vmem:[%s413 + $0x18] sm:$0xff]
        %v706 = vld [vmem:[%s413 + $0x20] sm:$0xff]
        %v707 = vld [vmem:[%s413 + $0x28] sm:$0xff]
        %v708 = vld [vmem:[%s413 + $0x30] sm:$0xff]
        %v709 = vld [vmem:[%s413 + $0x38] sm:$0xff]
        %v710 = vld [vmem:[%s413 + $0x40] sm:$0x3]
        %v711 = vstv %s701
        %v712 = vmul.f32 %v711, %v702
        %v713 = vmul.f32 %v711, %v703
        %v714 = vmul.f32 %v711, %v704
        %v715 = vmul.f32 %v711, %v705
        %v716 = vmul.f32 %v711, %v706
        %v717 = vmul.f32 %v711, %v707
        %v718 = vmul.f32 %v711, %v708
        %v719 = vmul.f32 %v711, %v709
        %v720 = vmul.f32 %v711, %v710
        %v721 = vadd.f32 %v692, %v712
        %v722 = vadd.f32 %v693, %v713
        %v723 = vadd.f32 %v694, %v714
        %v724 = vadd.f32 %v695, %v715
        %v725 = vadd.f32 %v696, %v716
        %v726 = vadd.f32 %v697, %v717
        %v727 = vadd.f32 %v698, %v718
        %v728 = vadd.f32 %v699, %v719
        %v729 = vadd.f32 %v700, %v720
        %s730 = sld [smem:[#allocation3 + $0x102]]
        %v731 = vld [vmem:[%s443] sm:$0xff]
        %v732 = vld [vmem:[%s443 + $0x8] sm:$0xff]
        %v733 = vld [vmem:[%s443 + $0x10] sm:$0xff]
        %v734 = vld [vmem:[%s443 + $0x18] sm:$0xff]
        %v735 = vld [vmem:[%s443 + $0x20] sm:$0xff]
        %v736 = vld [vmem:[%s443 + $0x28] sm:$0xff]
        %v737 = vld [vmem:[%s443 + $0x30] sm:$0xff]
        %v738 = vld [vmem:[%s443 + $0x38] sm:$0xff]
        %v739 = vld [vmem:[%s443 + $0x40] sm:$0x3]
        %v740 = vstv %s730
        %v741 = vmul.f32 %v740, %v731
        %v742 = vmul.f32 %v740, %v732
        %v743 = vmul.f32 %v740, %v733
        %v744 = vmul.f32 %v740, %v734
        %v745 = vmul.f32 %v740, %v735
        %v746 = vmul.f32 %v740, %v736
        %v747 = vmul.f32 %v740, %v737
        %v748 = vmul.f32 %v740, %v738
        %v749 = vmul.f32 %v740, %v739
        %v750 = vadd.f32 %v721, %v741
        %v751 = vadd.f32 %v722, %v742
        %v752 = vadd.f32 %v723, %v743
        %v753 = vadd.f32 %v724, %v744
        %v754 = vadd.f32 %v725, %v745
        %v755 = vadd.f32 %v726, %v746
        %v756 = vadd.f32 %v727, %v747
        %v757 = vadd.f32 %v728, %v748
        %v758 = vadd.f32 %v729, %v749
        %s759 = sld [smem:[#allocation6 + $0x2]]
        %v760 = vstv %s759
        %v761 = vadd.f32 %v750, %v760
        %v762 = vadd.f32 %v751, %v760
        %v763 = vadd.f32 %v752, %v760
        %v764 = vadd.f32 %v753, %v760
        %v765 = vadd.f32 %v754, %v760
        %v766 = vadd.f32 %v755, %v760
        %v767 = vadd.f32 %v756, %v760
        %v768 = vadd.f32 %v757, %v760
        %v769 = vadd.f32 %v758, %v760
        %v770 = vadd.f32 %v761, 3.0
        %v771 = vadd.f32 %v762, 3.0
        %v772 = vadd.f32 %v763, 3.0
        %v773 = vadd.f32 %v764, 3.0
        %v774 = vadd.f32 %v765, 3.0
        %v775 = vadd.f32 %v766, 3.0
        %v776 = vadd.f32 %v767, 3.0
        %v777 = vadd.f32 %v768, 3.0
        %v778 = vadd.f32 %v769, 3.0
        %v779 = vmax.f32 %v770, 0.0
        %v780 = vmax.f32 %v771, 0.0
        %v781 = vmax.f32 %v772, 0.0
        %v782 = vmax.f32 %v773, 0.0
        %v783 = vmax.f32 %v774, 0.0
        %v784 = vmax.f32 %v775, 0.0
        %v785 = vmax.f32 %v776, 0.0
        %v786 = vmax.f32 %v777, 0.0
        %v787 = vmax.f32 %v778, 0.0
        %v788 = vmin.f32 %v779, 6.0
        %v789 = vmin.f32 %v780, 6.0
        %v790 = vmin.f32 %v781, 6.0
        %v791 = vmin.f32 %v782, 6.0
        %v792 = vmin.f32 %v783, 6.0
        %v793 = vmin.f32 %v784, 6.0
        %v794 = vmin.f32 %v785, 6.0
        %v795 = vmin.f32 %v786, 6.0
        %v796 = vmin.f32 %v787, 6.0
        %v797 = vmul.f32 %v761, %v788
        %v798 = vmul.f32 %v762, %v789
        %v799 = vmul.f32 %v763, %v790
        %v800 = vmul.f32 %v764, %v791
        %v801 = vmul.f32 %v765, %v792
        %v802 = vmul.f32 %v766, %v793
        %v803 = vmul.f32 %v767, %v794
        %v804 = vmul.f32 %v768, %v795
        %v805 = vmul.f32 %v769, %v796
        %v806 = vmul.f32 %v797, 0.16666667
        %v807 = vmul.f32 %v798, 0.16666667
        %v808 = vmul.f32 %v799, 0.16666667
        %v809 = vmul.f32 %v800, 0.16666667
        %v810 = vmul.f32 %v801, 0.16666667
        %v811 = vmul.f32 %v802, 0.16666667
        %v812 = vmul.f32 %v803, 0.16666667
        %v813 = vmul.f32 %v804, 0.16666667
        %v814 = vmul.f32 %v805, 0.16666667
        %s815 = scalar_lea.vmem %s217, 144
        %816 = vst.msk [vmem:[%s815] sm:$0xff] %vm218, %v806
        %817 = vst.msk [vmem:[%s815 + $0x8] sm:$0xff] %vm218, %v807
        %818 = vst.msk [vmem:[%s815 + $0x10] sm:$0xff] %vm218, %v808
        %819 = vst.msk [vmem:[%s815 + $0x18] sm:$0xff] %vm218, %v809
        %820 = vst.msk [vmem:[%s815 + $0x20] sm:$0xff] %vm218, %v810
        %821 = vst.msk [vmem:[%s815 + $0x28] sm:$0xff] %vm218, %v811
        %822 = vst.msk [vmem:[%s815 + $0x30] sm:$0xff] %vm218, %v812
        %823 = vst.msk [vmem:[%s815 + $0x38] sm:$0xff] %vm218, %v813
        %824 = vst.msk [vmem:[%s815 + $0x40] sm:$0x3] %vm227, %v814
        %p825 = scmp.lt.s32.totalorder %s19, 1
        %s826 = scalar_select %p825, %s19, 1
        %s827 = smul.addr %s826, 27
        %s828 = smul.addr %s827, 8
        %s829 = scalar_lea.vmem %s3, %s828
        // Predicated region
        $region45: #{conv1x1_pad1_hardswish.1} parent=31 // pred_check
          %p830 = pneg %p105
        $region46: #{conv1x1_pad1_hardswish.1} parent=31 // pred_check_branch
          %832 = sbr.rel (%p830) target = $region48
        $region47: #{conv1x1_pad1_hardswish.1} parent=31 // pred_region
          _
        $region48: #{conv1x1_pad1_hardswish.1} parent=31 // pred_fallthru
          _
      $region32: #{conv1x1_pad1_hardswish.1} parent=5 // pred_fallthru
        _
      %p833 = scmp.le.s32.totalorder 2, %s14
      // Predicated region
      $region49: #{conv1x1_pad1_hardswish.1} parent=5 // pred_check
        %p834 = pneg %p833
      $region50: #{conv1x1_pad1_hardswish.1} parent=5 // pred_check_branch
        %836 = sbr.rel (%p834) target = $region52
      $region51: #{conv1x1_pad1_hardswish.1} parent=5 // pred_region
        %s837 = ssub.s32 %s14, 2
        // Predicated region
        $region53: #{conv1x1_pad1_hardswish.1} parent=51 // pred_check
          %p838 = pneg %p111
        $region54: #{conv1x1_pad1_hardswish.1} parent=51 // pred_check_branch
          %840 = sbr.rel (%p838) target = $region56
        $region55: #{conv1x1_pad1_hardswish.1} parent=51 // pred_region
          %p841 = scmp.lt.s32.totalorder %s20, 1
          %s842 = scalar_select %p841, %s20, 1
          %s843 = smul.addr %s842, 27
          %s844 = smul.addr %s843, 8
          %s845 = scalar_lea.vmem %s3, %s844
        $region56: #{conv1x1_pad1_hardswish.1} parent=51 // pred_fallthru
          _
      $region52: #{conv1x1_pad1_hardswish.1} parent=5 // pred_fallthru
        _
    $region6: #{conv1x1_pad1_hardswish.1} parent=1 // loop_footer
      %s18 = sadd.s32 1, %s14
    $region7: #{conv1x1_pad1_hardswish.1} parent=1 // loop_footer_branch
      %13 = sbr.rel target = $region3
    $region8: #{conv1x1_pad1_hardswish.1} parent=1 // loop_exit
      _
    %846 = vsyncpa [#allocation4], 1
    %s847 = scalar_lea.sflag [#allocation4], 1
    %848 = vsyncpa %s847, 1
    %849 = vsyncpa [#allocation5], 1
    %s850 = scalar_lea.sflag [#allocation5], 1
    %851 = vsyncpa %s850, 1
    %852 = vsyncpa [#allocation7], 1

</llo_original>
